<compile_context>
chip_gen: v7x
topology: tpu7x:2x2x1
jax: 0.10.0
libtpu: 0.0.40
codegen_flags: <defaults>
</compile_context>

<pallas_src>
import jax
import jax.numpy as jnp
import numpy as np
from jax import lax
from jax.experimental import pallas as pl
from jax.experimental.pallas import tpu as pltpu


def _round_up(n, m):
    return ((n + m - 1) // m) * m


def _cdiv(a, b):
    return (a + b - 1) // b


def _pos_enc_kernel(xh_ref, scale_ref, out_ref):
    # xh_ref:    (TM, K)   folded homogeneous coords [x0 y0 z0 x1 y1 z1 ... 1]
    # scale_ref: (K, Df)   omega per (fold, axis) block; last row = pi/2 on cos cols
    # out_ref:   (TM, Df)  Df = fold * d_model, a multiple of 128 lanes
    #
    # phase[r, j] = pos * omega + (pi/2 on cos columns), computed on the MXU so
    # the VALU/EUP are free for the sin.  HIGHEST precision keeps f32 accuracy.
    phase = lax.dot_general(
        xh_ref[...],
        scale_ref[...],
        dimension_numbers=(((1,), (0,)), ((), ())),
        preferred_element_type=jnp.float32,
        precision=lax.Precision.HIGHEST,
    )
    # Single wide transcendental + one contiguous, unmasked lane-dense store.
    out_ref[...] = jnp.sin(phase).astype(out_ref.dtype)


def positional_encoding_xyz(x, d_model=64 * 3, tile_m=4096):
    """x: (M, 3) float array of xyz positions -> (M, d_model) sincos embedding."""
    assert d_model % 6 == 0, "d_model must be divisible by 6 (2 * 3 axes)"
    M = x.shape[0]
    if M == 0:
        return jnp.zeros((0, d_model), dtype=jnp.float32)

    half = d_model // 6          # frequencies per (sin|cos) half
    two_half = 2 * half          # embedding width per axis

    # Row-fold factor so the folded output width is a multiple of 128 lanes.
    fold = 1
    while (fold * d_model) % 128 != 0 and fold * d_model < 4096:
        fold += 1
    if (fold * d_model) % 128 != 0:
        fold = 1                 # fallback: correct, just lane-masked stores
    d_fold = fold * d_model      # e.g. 2 * 192 = 384 = 3 lane-vregs
    k_dim = fold * 3 + 1         # homogeneous column carries the pi/2 offsets

    # Host-precomputed phase matrix (tiny; resident across grid steps).
    omega = 1.0 / (10000.0 ** (np.arange(half, dtype=np.float32) / np.float32(half)))
    omega2 = np.concatenate([omega, omega])          # (two_half,)
    scale_np = np.zeros((k_dim, d_fold), dtype=np.float32)
    for b in range(fold):
        base = b * d_model
        for c in range(3):
            lo = base + c * two_half
            scale_np[b * 3 + c, lo:lo + two_half] = omega2
            # cos columns of this axis get a +pi/2 phase from the ones column.
            scale_np[k_dim - 1, lo + half:lo + two_half] = np.float32(np.pi / 2.0)
    scale = jnp.asarray(scale_np)

    x = x.astype(jnp.float32)

    # Tile sizing in folded rows: balanced tail, >=2 grid steps when there is
    # enough work (v7x megacore), and a cap that fits every gen's scoped VMEM.
    rows_f = _cdiv(M, fold)
    tm_max = max(8, (max(int(tile_m), 1) // fold // 8) * 8)
    n_steps = _cdiv(rows_f, tm_max)
    if n_steps == 1 and rows_f >= 1024:
        n_steps = 2              # let "parallel" shard across both v7x TensorCores
    tm = max(8, _round_up(_cdiv(rows_f, n_steps), 8))
    rows_padded = tm * n_steps
    m_padded = rows_padded * fold

    if m_padded != M:
        x = jnp.pad(x, ((0, m_padded - M), (0, 0)))
    x_folded = x.reshape(rows_padded, fold * 3)
    x_h = jnp.concatenate(
        [x_folded, jnp.ones((rows_padded, 1), dtype=jnp.float32)], axis=1
    )

    cost = pl.CostEstimate(
        flops=2 * rows_padded * k_dim * d_fold,          # phase matmul
        transcendentals=rows_padded * d_fold,            # one sin per output elem
        bytes_accessed=rows_padded * (k_dim + d_fold) * 4 + k_dim * d_fold * 4,
    )

    out = pl.pallas_call(
        _pos_enc_kernel,
        out_shape=jax.ShapeDtypeStruct((rows_padded, d_fold), jnp.float32),
        grid_spec=pltpu.PrefetchScalarGridSpec(
            num_scalar_prefetch=0,
            grid=(n_steps,),
            in_specs=[
                pl.BlockSpec((tm, k_dim), lambda i: (i, 0)),
                pl.BlockSpec((k_dim, d_fold), lambda i: (0, 0)),
            ],
            out_specs=pl.BlockSpec((tm, d_fold), lambda i: (i, 0)),
        ),
        compiler_params=pltpu.CompilerParams(
            dimension_semantics=("parallel",),
            vmem_limit_bytes=32 * 1024 * 1024,
        ),
        cost_estimate=cost,
    )(x_h, scale)

    # Free reshape: folded row r, column block b == original row r*fold + b.
    out = out.reshape(m_padded, d_model)
    return out[:M] if m_padded != M else out


def _reference(x, d_model=64 * 3):
    """Pure-JAX reference matching the PyTorch module exactly."""
    half = d_model // 6
    omega = 1.0 / (10000.0 ** (jnp.arange(half, dtype=jnp.float32) / float(half)))

    def one_axis(pos):
        out = jnp.einsum("m,d->md", pos, omega)
        return jnp.concatenate([jnp.sin(out), jnp.cos(out)], axis=1)

    return jnp.concatenate(
        [one_axis(x[:, 0]), one_axis(x[:, 1]), one_axis(x[:, 2])], axis=1
    )


if __name__ == "__main__":
    d_model = 64 * 3  # default of PositionalEncodingXYZ

    # Case 1: small batch of xyz positions.
    M = 16
    x = jax.random.uniform(
        jax.random.PRNGKey(0), (M, 3), dtype=jnp.float32, minval=-4.0, maxval=4.0
    )
    out = jax.block_until_ready(positional_encoding_xyz(x, d_model=d_model))
    ref = jax.block_until_ready(_reference(x, d_model=d_model))
    assert out.shape == (M, d_model)
    assert np.allclose(np.asarray(out), np.asarray(ref), atol=2e-5, rtol=1e-5)

    # Case 2: ragged/odd row count with small tiles (multi-step grid + pad/slice tail).
    M2 = 37
    x2 = jax.random.uniform(
        jax.random.PRNGKey(1), (M2, 3), dtype=jnp.float32, minval=-4.0, maxval=4.0
    )
    out2 = jax.block_until_ready(positional_encoding_xyz(x2, d_model=d_model, tile_m=16))
    ref2 = jax.block_until_ready(_reference(x2, d_model=d_model))
    assert out2.shape == (M2, d_model)
    assert np.allclose(np.asarray(out2), np.asarray(ref2), atol=2e-5, rtol=1e-5)

    print("KERNEL_OK")
</pallas_src>

<mosaic_0001>
module attributes {stable_mosaic.version = 11 : i64} {
  func.func @_pos_enc_kernel(%arg0: i32, %arg1: memref<8x7xf32, #tpu.memory_space<vmem>>, %arg2: memref<7x384xf32, #tpu.memory_space<vmem>>, %arg3: memref<8x384xf32, #tpu.memory_space<vmem>>) attributes {dimension_semantics = [#tpu.dimension_semantics<parallel>], iteration_bounds = array<i64: 1>, scalar_prefetch = 0 : i64, scratch_operands = 0 : i64, tpu.core_type = #tpu.core_type<tc>, window_params = [{transform_indices = @transform_0, window_bounds = array<i64: 8, 7>}, {pipeline_mode = #tpu.pipeline_mode<synchronous>, transform_indices = @transform_1, window_bounds = array<i64: 7, 384>}, {transform_indices = @transform_2, window_bounds = array<i64: 8, 384>}]} {
    %c0 = arith.constant 0 : index
    %c0_0 = arith.constant 0 : index
    %0 = vector.load %arg1[%c0, %c0_0] : memref<8x7xf32, #tpu.memory_space<vmem>>, vector<8x7xf32>
    %c0_1 = arith.constant 0 : index
    %c0_2 = arith.constant 0 : index
    %1 = vector.load %arg2[%c0_1, %c0_2] : memref<7x384xf32, #tpu.memory_space<vmem>>, vector<7x384xf32>
    %cst = arith.constant dense<0.000000e+00> : vector<8x384xf32>
    %2 = tpu.matmul %0, %1, %cst {dimension_numbers = #tpu.dot_dimension_numbers<[1], [0], [0], [1], [0, 0, 1, 1], [], []>, precision = #tpu.contract_precision<fp32>} : vector<8x7xf32>, vector<7x384xf32>, vector<8x384xf32> -> vector<8x384xf32>
    %3 = math.sin %2 : vector<8x384xf32>
    %c0_3 = arith.constant 0 : index
    %c0_4 = arith.constant 0 : index
    %4 = vector.load %arg3[%c0_3, %c0_4] : memref<8x384xf32, #tpu.memory_space<vmem>>, vector<8x384xf32>
    tpu.vector_store %arg3[%c0_3, %c0_4], %3 {strides = array<i32>} : memref<8x384xf32, #tpu.memory_space<vmem>>, vector<8x384xf32>,
    return
  }
  func.func @transform_0(%arg0: i32) -> (i32, i32) {
    %c0_i32 = arith.constant 0 : i32
    %c0_i32_0 = arith.constant 0 : i32
    return %arg0, %c0_i32 : i32, i32
  }
  func.func @transform_1(%arg0: i32) -> (i32, i32) {
    %c0_i32 = arith.constant 0 : i32
    %c0_i32_0 = arith.constant 0 : i32
    %c0_i32_1 = arith.constant 0 : i32
    return %c0_i32, %c0_i32_0 : i32, i32
  }
  func.func @transform_2(%arg0: i32) -> (i32, i32) {
    %c0_i32 = arith.constant 0 : i32
    %c0_i32_0 = arith.constant 0 : i32
    return %arg0, %c0_i32 : i32, i32
  }
}

</mosaic_0001>

<llo_original>
// kernel: tpu_custom_call.1
$region0: #{tpu_custom_call.1}
  #allocation0 [shape = 'u32[]', space=smem, size = 0x4, offset = 0x4, fixed_abs, tag = 'smem constant byte address 0x4 - core index']
  #allocation1 [shape = 'u32[144,128]{1,0:T(1,128)}', space=vmem, size = 0x12000, scoped, tag = 'internal scratch']
  %s0 = inlined_call_operand.hbm [shape: f32[8,7], index: 0, kind: input, shape index: {}]
  %s1 = inlined_call_operand.hbm [shape: f32[7,384], index: 1, kind: input, shape index: {}]
  %s2 = inlined_call_operand.hbm [shape: f32[8,384], index: 2, kind: output, shape index: {}]
  %s3 = sld [smem:[#allocation0]]
  $region26: #{tpu_custom_call.1} parent=0
    _
  %s5 = ssub.s32 1, %s3
  %s6 = scalar_select 0, %s5, %s3
  $region1: #{tpu_custom_call.1} parent=0
    #allocation2 [shape = 'u8[4096]{0}', space=vmem, size = 0x1000, scoped, tag = 'input window, operand 0, single buffered']
    #allocation3 [shape = 's32[1]{0}', space=sflag, size = 0x4, scoped, tag = 'scoped memory for tpu_custom_call.1']
    #allocation4 [shape = 's32[1]{0}', space=sflag, size = 0x4, scoped, tag = 'scoped memory for tpu_custom_call.1']
    #allocation5 [shape = 'u8[12288]{0}', space=vmem, size = 0x3000, scoped, tag = 'input window, operand 1, single buffered']
    #allocation6 [shape = 's32[1]{0}', space=sflag, size = 0x4, scoped, tag = 'scoped memory for tpu_custom_call.1']
    #allocation7 [shape = 'u8[12288]{0}', space=vmem, size = 0x3000, scoped, tag = 'output window, operand 0, single buffered']
    %7 = vsyncpa [#allocation3], 0
    %8 = vsyncpa [#allocation6], 0
    %9 = vsyncpa [#allocation4], 0
    // Predicated region
    $region2: #{tpu_custom_call.1} parent=1 // pred_check
      _
    $region3: #{tpu_custom_call.1} parent=1 // pred_check_branch
      %11 = sbr.rel (0) target = $region5
    $region4: #{tpu_custom_call.1} parent=1 // pred_region
      %s13 = ssub.s32 128, 128
      %14 = vsyncadd [#allocation3], %s13
      %s16 = sshll.u32 [#allocation2], 4
      %s17 = int_to_ptr.vmem [resolvable:$true] %s16
      %19 = dma.hbm_to_vmem [thread:$0]  %s0, 128, %s17, [#allocation3]
    $region5: #{tpu_custom_call.1} parent=1 // pred_fallthru
      _
    // Predicated region
    $region6: #{tpu_custom_call.1} parent=1 // pred_check
      _
    $region7: #{tpu_custom_call.1} parent=1 // pred_check_branch
      %21 = sbr.rel (0) target = $region9
    $region8: #{tpu_custom_call.1} parent=1 // pred_region
      %s23 = ssub.s32 384, 384
      %24 = vsyncadd [#allocation6], %s23
      %s26 = sshll.u32 [#allocation5], 4
      %s27 = int_to_ptr.vmem [resolvable:$true] %s26
      %29 = dma.hbm_to_vmem [thread:$0]  %s1, 384, %s27, [#allocation6]
    $region9: #{tpu_custom_call.1} parent=1 // pred_fallthru
      _
    // Predicated region
    $region10: #{tpu_custom_call.1} parent=1 // pred_check
      _
    $region11: #{tpu_custom_call.1} parent=1 // pred_check_branch
      %31 = sbr.rel (0) target = $region13
    $region12: #{tpu_custom_call.1} parent=1 // pred_region
      %32 = dma.done [#allocation3], 128
    $region13: #{tpu_custom_call.1} parent=1 // pred_fallthru
      _
    // Predicated region
    $region14: #{tpu_custom_call.1} parent=1 // pred_check
      _
    $region15: #{tpu_custom_call.1} parent=1 // pred_check_branch
      %34 = sbr.rel (0) target = $region17
    $region16: #{tpu_custom_call.1} parent=1 // pred_region
      %35 = dma.done [#allocation6], 384
    $region17: #{tpu_custom_call.1} parent=1 // pred_fallthru
      _
    %v36 = vld [vmem:[#allocation2] sm:$0xff]
    %v37 = vld [vmem:[#allocation5] sm:$0x7f]
    %v38 = vld [vmem:[#allocation5 + $0x8] sm:$0x7f]
    %v39 = vld [vmem:[#allocation5 + $0x10] sm:$0x7f]
    %vm40 = vcmask 56320
    %v42 = vsel %vm40, %v36, 0
    %vm44 = vcmask 1046528
    %v46 = vsel %vm44, %v37, 0
    %v49 = vsel %vm44, %v38, 0
    %v52 = vsel %vm44, %v39, 0
    %v54 = vand.u32 %v49, 4294901760
    %55 = vmatprep.subr.mxu0 %v54
    %v56 = vand.u32 %v46, 4294901760
    %57 = vmatpush1.msra.mxu0 %v56
    %58 = vmatprep.subr.mxu0 0.0
    %59 = vmatpush1.msra.mxu0 0.0
    %60 = vmatprep.subr.mxu0 0.0
    %61 = vmatpush1.msra.mxu0 0.0
    %62 = vmatprep.subr.mxu0 0.0
    %63 = vmatpush1.msra.mxu0 0.0
    %64 = vmatprep.subr.mxu0 0.0
    %65 = vmatpush1.msra.mxu0 0.0
    %66 = vmatprep.subr.mxu0 0.0
    %67 = vmatpush1.msra.mxu0 0.0
    %68 = vmatprep.subr.mxu0 0.0
    %69 = vmatpush1.msra.mxu0 0.0
    %70 = vmatprep.subr.mxu0 0.0
    %71 = vmatpush1.msra.mxu0 0.0
    %72 = vmatprep.subr.mxu0 0.0
    %73 = vmatpush1.msra.mxu0 0.0
    %74 = vmatprep.subr.mxu0 0.0
    %75 = vmatpush1.msra.mxu0 0.0
    %76 = vmatprep.subr.mxu0 0.0
    %77 = vmatpush1.msra.mxu0 0.0
    %78 = vmatprep.subr.mxu0 0.0
    %79 = vmatpush1.msra.mxu0 0.0
    %80 = vmatprep.subr.mxu0 0.0
    %81 = vmatpush1.msra.mxu0 0.0
    %82 = vmatprep.subr.mxu0 0.0
    %83 = vmatpush1.msra.mxu0 0.0
    %84 = vmatprep.subr.mxu0 0.0
    %85 = vmatpush1.msra.mxu0 0.0
    %86 = vmatprep.subr.mxu0 0.0
    %87 = vmatpush1.msra.mxu0 0.0
    %88 = vmatprep.subr.mxu0 0.0
    %89 = vmatpush1.msra.mxu0 0.0
    %90 = vmatprep.subr.mxu0 0.0
    %91 = vmatpush1.msra.mxu0 0.0
    %92 = vmatprep.subr.mxu0 0.0
    %93 = vmatpush1.msra.mxu0 0.0
    %94 = vmatprep.subr.mxu0 0.0
    %95 = vmatpush1.msra.mxu0 0.0
    %96 = vmatprep.subr.mxu0 0.0
    %97 = vmatpush1.msra.mxu0 0.0
    %98 = vmatprep.subr.mxu0 0.0
    %99 = vmatpush1.msra.mxu0 0.0
    %100 = vmatprep.subr.mxu0 0.0
    %101 = vmatpush1.msra.mxu0 0.0
    %102 = vmatprep.subr.mxu0 0.0
    %103 = vmatpush1.msra.mxu0 0.0
    %104 = vmatprep.subr.mxu0 0.0
    %105 = vmatpush1.msra.mxu0 0.0
    %106 = vmatprep.subr.mxu0 0.0
    %107 = vmatpush1.msra.mxu0 0.0
    %108 = vmatprep.subr.mxu0 0.0
    %109 = vmatpush1.msra.mxu0 0.0
    %110 = vmatprep.subr.mxu0 0.0
    %111 = vmatpush1.msra.mxu0 0.0
    %112 = vmatprep.subr.mxu0 0.0
    %113 = vmatpush1.msra.mxu0 0.0
    %114 = vmatprep.subr.mxu0 0.0
    %115 = vmatpush1.msra.mxu0 0.0
    %116 = vmatprep.subr.mxu0 0.0
    %117 = vmatpush1.msra.mxu0 0.0
    %118 = vmatprep.subr.mxu0 0.0
    %119 = vmatpush1.msra.mxu0 0.0
    %120 = vmatprep.mubr.f32.mxu0 0.0
    %v121 = vand.u32 %v42, 4294901760
    %v122 = vsub.f32 %v42, %v121
    %v123 = vand.u32 %v122, 4294901760
    %v124 = vsub.f32 %v122, %v123
    %v125 = vand.u32 %v124, 4294901760
    %126 = vmatmul.mubr.f32.gmra.mrb[0].mxu0 %v125
    %v127 = vpop.f32.mrb[0].mxu0
    %v128 = vadd.f32 0.0, %v127
    %v129 = vpop.f32.mrb[0].mxu0
    %v130 = vadd.f32 0.0, %v129
    %131 = vdwg.mxu0
    %v132 = vand.u32 %v49, 4294901760
    %v133 = vsub.f32 %v49, %v132
    %v134 = vand.u32 %v133, 4294901760
    %v135 = vsub.f32 %v133, %v134
    %v136 = vand.u32 %v135, 4294901760
    %137 = vmatprep.subr.mxu0 %v136
    %v138 = vand.u32 %v46, 4294901760
    %v139 = vsub.f32 %v46, %v138
    %v140 = vand.u32 %v139, 4294901760
    %v141 = vsub.f32 %v139, %v140
    %v142 = vand.u32 %v141, 4294901760
    %143 = vmatpush1.msra.mxu0 %v142
    %144 = vmatprep.subr.mxu0 0.0
    %145 = vmatpush1.msra.mxu0 0.0
    %146 = vmatprep.subr.mxu0 0.0
    %147 = vmatpush1.msra.mxu0 0.0
    %148 = vmatprep.subr.mxu0 0.0
    %149 = vmatpush1.msra.mxu0 0.0
    %150 = vmatprep.subr.mxu0 0.0
    %151 = vmatpush1.msra.mxu0 0.0
    %152 = vmatprep.subr.mxu0 0.0
    %153 = vmatpush1.msra.mxu0 0.0
    %154 = vmatprep.subr.mxu0 0.0
    %155 = vmatpush1.msra.mxu0 0.0
    %156 = vmatprep.subr.mxu0 0.0
    %157 = vmatpush1.msra.mxu0 0.0
    %158 = vmatprep.subr.mxu0 0.0
    %159 = vmatpush1.msra.mxu0 0.0
    %160 = vmatprep.subr.mxu0 0.0
    %161 = vmatpush1.msra.mxu0 0.0
    %162 = vmatprep.subr.mxu0 0.0
    %163 = vmatpush1.msra.mxu0 0.0
    %164 = vmatprep.subr.mxu0 0.0
    %165 = vmatpush1.msra.mxu0 0.0
    %166 = vmatprep.subr.mxu0 0.0
    %167 = vmatpush1.msra.mxu0 0.0
    %168 = vmatprep.subr.mxu0 0.0
    %169 = vmatpush1.msra.mxu0 0.0
    %170 = vmatprep.subr.mxu0 0.0
    %171 = vmatpush1.msra.mxu0 0.0
    %172 = vmatprep.subr.mxu0 0.0
    %173 = vmatpush1.msra.mxu0 0.0
    %174 = vmatprep.subr.mxu0 0.0
    %175 = vmatpush1.msra.mxu0 0.0
    %176 = vmatprep.subr.mxu0 0.0
    %177 = vmatpush1.msra.mxu0 0.0
    %178 = vmatprep.subr.mxu0 0.0
    %179 = vmatpush1.msra.mxu0 0.0
    %180 = vmatprep.subr.mxu0 0.0
    %181 = vmatpush1.msra.mxu0 0.0
    %182 = vmatprep.subr.mxu0 0.0
    %183 = vmatpush1.msra.mxu0 0.0
    %184 = vmatprep.subr.mxu0 0.0
    %185 = vmatpush1.msra.mxu0 0.0
    %186 = vmatprep.subr.mxu0 0.0
    %187 = vmatpush1.msra.mxu0 0.0
    %188 = vmatprep.subr.mxu0 0.0
    %189 = vmatpush1.msra.mxu0 0.0
    %190 = vmatprep.subr.mxu0 0.0
    %191 = vmatpush1.msra.mxu0 0.0
    %192 = vmatprep.subr.mxu0 0.0
    %193 = vmatpush1.msra.mxu0 0.0
    %194 = vmatprep.subr.mxu0 0.0
    %195 = vmatpush1.msra.mxu0 0.0
    %196 = vmatprep.subr.mxu0 0.0
    %197 = vmatpush1.msra.mxu0 0.0
    %198 = vmatprep.subr.mxu0 0.0
    %199 = vmatpush1.msra.mxu0 0.0
    %200 = vmatprep.subr.mxu0 0.0
    %201 = vmatpush1.msra.mxu0 0.0
    %202 = vmatprep.subr.mxu0 0.0
    %203 = vmatpush1.msra.mxu0 0.0
    %204 = vmatprep.subr.mxu0 0.0
    %205 = vmatpush1.msra.mxu0 0.0
    %206 = vmatprep.mubr.f32.mxu0 0.0
    %v207 = vand.u32 %v42, 4294901760
    %208 = vmatmul.mubr.f32.gmra.mrb[0].mxu0 %v207
    %v209 = vpop.f32.mrb[0].mxu0
    %v210 = vadd.f32 %v128, %v209
    %v211 = vpop.f32.mrb[0].mxu0
    %v212 = vadd.f32 %v130, %v211
    %213 = vdwg.mxu0
    %v214 = vand.u32 %v49, 4294901760
    %v215 = vsub.f32 %v49, %v214
    %216 = vmatprep.subr.mxu0 %v215
    %v217 = vand.u32 %v46, 4294901760
    %v218 = vsub.f32 %v46, %v217
    %219 = vmatpush1.msra.mxu0 %v218
    %220 = vmatprep.subr.mxu0 0.0
    %221 = vmatpush1.msra.mxu0 0.0
    %222 = vmatprep.subr.mxu0 0.0
    %223 = vmatpush1.msra.mxu0 0.0
    %224 = vmatprep.subr.mxu0 0.0
    %225 = vmatpush1.msra.mxu0 0.0
    %226 = vmatprep.subr.mxu0 0.0
    %227 = vmatpush1.msra.mxu0 0.0
    %228 = vmatprep.subr.mxu0 0.0
    %229 = vmatpush1.msra.mxu0 0.0
    %230 = vmatprep.subr.mxu0 0.0
    %231 = vmatpush1.msra.mxu0 0.0
    %232 = vmatprep.subr.mxu0 0.0
    %233 = vmatpush1.msra.mxu0 0.0
    %234 = vmatprep.subr.mxu0 0.0
    %235 = vmatpush1.msra.mxu0 0.0
    %236 = vmatprep.subr.mxu0 0.0
    %237 = vmatpush1.msra.mxu0 0.0
    %238 = vmatprep.subr.mxu0 0.0
    %239 = vmatpush1.msra.mxu0 0.0
    %240 = vmatprep.subr.mxu0 0.0
    %241 = vmatpush1.msra.mxu0 0.0
    %242 = vmatprep.subr.mxu0 0.0
    %243 = vmatpush1.msra.mxu0 0.0
    %244 = vmatprep.subr.mxu0 0.0
    %245 = vmatpush1.msra.mxu0 0.0
    %246 = vmatprep.subr.mxu0 0.0
    %247 = vmatpush1.msra.mxu0 0.0
    %248 = vmatprep.subr.mxu0 0.0
    %249 = vmatpush1.msra.mxu0 0.0
    %250 = vmatprep.subr.mxu0 0.0
    %251 = vmatpush1.msra.mxu0 0.0
    %252 = vmatprep.subr.mxu0 0.0
    %253 = vmatpush1.msra.mxu0 0.0
    %254 = vmatprep.subr.mxu0 0.0
    %255 = vmatpush1.msra.mxu0 0.0
    %256 = vmatprep.subr.mxu0 0.0
    %257 = vmatpush1.msra.mxu0 0.0
    %258 = vmatprep.subr.mxu0 0.0
    %259 = vmatpush1.msra.mxu0 0.0
    %260 = vmatprep.subr.mxu0 0.0
    %261 = vmatpush1.msra.mxu0 0.0
    %262 = vmatprep.subr.mxu0 0.0
    %263 = vmatpush1.msra.mxu0 0.0
    %264 = vmatprep.subr.mxu0 0.0
    %265 = vmatpush1.msra.mxu0 0.0
    %266 = vmatprep.subr.mxu0 0.0
    %267 = vmatpush1.msra.mxu0 0.0
    %268 = vmatprep.subr.mxu0 0.0
    %269 = vmatpush1.msra.mxu0 0.0
    %270 = vmatprep.subr.mxu0 0.0
    %271 = vmatpush1.msra.mxu0 0.0
    %272 = vmatprep.subr.mxu0 0.0
    %273 = vmatpush1.msra.mxu0 0.0
    %274 = vmatprep.subr.mxu0 0.0
    %275 = vmatpush1.msra.mxu0 0.0
    %276 = vmatprep.subr.mxu0 0.0
    %277 = vmatpush1.msra.mxu0 0.0
    %278 = vmatprep.subr.mxu0 0.0
    %279 = vmatpush1.msra.mxu0 0.0
    %280 = vmatprep.subr.mxu0 0.0
    %281 = vmatpush1.msra.mxu0 0.0
    %282 = vmatprep.mubr.f32.mxu0 0.0
    %v283 = vand.u32 %v42, 4294901760
    %v284 = vsub.f32 %v42, %v283
    %285 = vmatmul.mubr.f32.gmra.mrb[0].mxu0 %v284
    %v286 = vpop.f32.mrb[0].mxu0
    %v287 = vadd.f32 %v210, %v286
    %v288 = vpop.f32.mrb[0].mxu0
    %v289 = vadd.f32 %v212, %v288
    %290 = vdwg.mxu0
    %v291 = vand.u32 %v49, 4294901760
    %292 = vmatprep.subr.mxu0 %v291
    %v293 = vand.u32 %v46, 4294901760
    %294 = vmatpush1.msra.mxu0 %v293
    %295 = vmatprep.subr.mxu0 0.0
    %296 = vmatpush1.msra.mxu0 0.0
    %297 = vmatprep.subr.mxu0 0.0
    %298 = vmatpush1.msra.mxu0 0.0
    %299 = vmatprep.subr.mxu0 0.0
    %300 = vmatpush1.msra.mxu0 0.0
    %301 = vmatprep.subr.mxu0 0.0
    %302 = vmatpush1.msra.mxu0 0.0
    %303 = vmatprep.subr.mxu0 0.0
    %304 = vmatpush1.msra.mxu0 0.0
    %305 = vmatprep.subr.mxu0 0.0
    %306 = vmatpush1.msra.mxu0 0.0
    %307 = vmatprep.subr.mxu0 0.0
    %308 = vmatpush1.msra.mxu0 0.0
    %309 = vmatprep.subr.mxu0 0.0
    %310 = vmatpush1.msra.mxu0 0.0
    %311 = vmatprep.subr.mxu0 0.0
    %312 = vmatpush1.msra.mxu0 0.0
    %313 = vmatprep.subr.mxu0 0.0
    %314 = vmatpush1.msra.mxu0 0.0
    %315 = vmatprep.subr.mxu0 0.0
    %316 = vmatpush1.msra.mxu0 0.0
    %317 = vmatprep.subr.mxu0 0.0
    %318 = vmatpush1.msra.mxu0 0.0
    %319 = vmatprep.subr.mxu0 0.0
    %320 = vmatpush1.msra.mxu0 0.0
    %321 = vmatprep.subr.mxu0 0.0
    %322 = vmatpush1.msra.mxu0 0.0
    %323 = vmatprep.subr.mxu0 0.0
    %324 = vmatpush1.msra.mxu0 0.0
    %325 = vmatprep.subr.mxu0 0.0
    %326 = vmatpush1.msra.mxu0 0.0
    %327 = vmatprep.subr.mxu0 0.0
    %328 = vmatpush1.msra.mxu0 0.0
    %329 = vmatprep.subr.mxu0 0.0
    %330 = vmatpush1.msra.mxu0 0.0
    %331 = vmatprep.subr.mxu0 0.0
    %332 = vmatpush1.msra.mxu0 0.0
    %333 = vmatprep.subr.mxu0 0.0
    %334 = vmatpush1.msra.mxu0 0.0
    %335 = vmatprep.subr.mxu0 0.0
    %336 = vmatpush1.msra.mxu0 0.0
    %337 = vmatprep.subr.mxu0 0.0
    %338 = vmatpush1.msra.mxu0 0.0
    %339 = vmatprep.subr.mxu0 0.0
    %340 = vmatpush1.msra.mxu0 0.0
    %341 = vmatprep.subr.mxu0 0.0
    %342 = vmatpush1.msra.mxu0 0.0
    %343 = vmatprep.subr.mxu0 0.0
    %344 = vmatpush1.msra.mxu0 0.0
    %345 = vmatprep.subr.mxu0 0.0
    %346 = vmatpush1.msra.mxu0 0.0
    %347 = vmatprep.subr.mxu0 0.0
    %348 = vmatpush1.msra.mxu0 0.0
    %349 = vmatprep.subr.mxu0 0.0
    %350 = vmatpush1.msra.mxu0 0.0
    %351 = vmatprep.subr.mxu0 0.0
    %352 = vmatpush1.msra.mxu0 0.0
    %353 = vmatprep.subr.mxu0 0.0
    %354 = vmatpush1.msra.mxu0 0.0
    %355 = vmatprep.subr.mxu0 0.0
    %356 = vmatpush1.msra.mxu0 0.0
    %357 = vmatprep.mubr.f32.mxu0 0.0
    %v358 = vand.u32 %v42, 4294901760
    %v359 = vsub.f32 %v42, %v358
    %v360 = vand.u32 %v359, 4294901760
    %361 = vmatmul.mubr.f32.gmra.mrb[0].mxu0 %v360
    %v362 = vpop.f32.mrb[0].mxu0
    %v363 = vadd.f32 %v287, %v362
    %v364 = vpop.f32.mrb[0].mxu0
    %v365 = vadd.f32 %v289, %v364
    %366 = vdwg.mxu0
    %v367 = vand.u32 %v49, 4294901760
    %v368 = vsub.f32 %v49, %v367
    %v369 = vand.u32 %v368, 4294901760
    %370 = vmatprep.subr.mxu0 %v369
    %v371 = vand.u32 %v46, 4294901760
    %v372 = vsub.f32 %v46, %v371
    %v373 = vand.u32 %v372, 4294901760
    %374 = vmatpush1.msra.mxu0 %v373
    %375 = vmatprep.subr.mxu0 0.0
    %376 = vmatpush1.msra.mxu0 0.0
    %377 = vmatprep.subr.mxu0 0.0
    %378 = vmatpush1.msra.mxu0 0.0
    %379 = vmatprep.subr.mxu0 0.0
    %380 = vmatpush1.msra.mxu0 0.0
    %381 = vmatprep.subr.mxu0 0.0
    %382 = vmatpush1.msra.mxu0 0.0
    %383 = vmatprep.subr.mxu0 0.0
    %384 = vmatpush1.msra.mxu0 0.0
    %385 = vmatprep.subr.mxu0 0.0
    %386 = vmatpush1.msra.mxu0 0.0
    %387 = vmatprep.subr.mxu0 0.0
    %388 = vmatpush1.msra.mxu0 0.0
    %389 = vmatprep.subr.mxu0 0.0
    %390 = vmatpush1.msra.mxu0 0.0
    %391 = vmatprep.subr.mxu0 0.0
    %392 = vmatpush1.msra.mxu0 0.0
    %393 = vmatprep.subr.mxu0 0.0
    %394 = vmatpush1.msra.mxu0 0.0
    %395 = vmatprep.subr.mxu0 0.0
    %396 = vmatpush1.msra.mxu0 0.0
    %397 = vmatprep.subr.mxu0 0.0
    %398 = vmatpush1.msra.mxu0 0.0
    %399 = vmatprep.subr.mxu0 0.0
    %400 = vmatpush1.msra.mxu0 0.0
    %401 = vmatprep.subr.mxu0 0.0
    %402 = vmatpush1.msra.mxu0 0.0
    %403 = vmatprep.subr.mxu0 0.0
    %404 = vmatpush1.msra.mxu0 0.0
    %405 = vmatprep.subr.mxu0 0.0
    %406 = vmatpush1.msra.mxu0 0.0
    %407 = vmatprep.subr.mxu0 0.0
    %408 = vmatpush1.msra.mxu0 0.0
    %409 = vmatprep.subr.mxu0 0.0
    %410 = vmatpush1.msra.mxu0 0.0
    %411 = vmatprep.subr.mxu0 0.0
    %412 = vmatpush1.msra.mxu0 0.0
    %413 = vmatprep.subr.mxu0 0.0
    %414 = vmatpush1.msra.mxu0 0.0
    %415 = vmatprep.subr.mxu0 0.0
    %416 = vmatpush1.msra.mxu0 0.0
    %417 = vmatprep.subr.mxu0 0.0
    %418 = vmatpush1.msra.mxu0 0.0
    %419 = vmatprep.subr.mxu0 0.0
    %420 = vmatpush1.msra.mxu0 0.0
    %421 = vmatprep.subr.mxu0 0.0
    %422 = vmatpush1.msra.mxu0 0.0
    %423 = vmatprep.subr.mxu0 0.0
    %424 = vmatpush1.msra.mxu0 0.0
    %425 = vmatprep.subr.mxu0 0.0
    %426 = vmatpush1.msra.mxu0 0.0
    %427 = vmatprep.subr.mxu0 0.0
    %428 = vmatpush1.msra.mxu0 0.0
    %429 = vmatprep.subr.mxu0 0.0
    %430 = vmatpush1.msra.mxu0 0.0
    %431 = vmatprep.subr.mxu0 0.0
    %432 = vmatpush1.msra.mxu0 0.0
    %433 = vmatprep.subr.mxu0 0.0
    %434 = vmatpush1.msra.mxu0 0.0
    %435 = vmatprep.subr.mxu0 0.0
    %436 = vmatpush1.msra.mxu0 0.0
    %437 = vmatprep.mubr.f32.mxu0 0.0
    %v438 = vand.u32 %v42, 4294901760
    %439 = vmatmul.mubr.f32.gmra.mrb[0].mxu0 %v438
    %v440 = vpop.f32.mrb[0].mxu0
    %v441 = vadd.f32 %v363, %v440
    %v442 = vpop.f32.mrb[0].mxu0
    %v443 = vadd.f32 %v365, %v442
    %444 = vdwg.mxu0
    %v445 = vand.u32 %v49, 4294901760
    %446 = vmatprep.subr.mxu0 %v445
    %v447 = vand.u32 %v46, 4294901760
    %448 = vmatpush1.msra.mxu0 %v447
    %449 = vmatprep.subr.mxu0 0.0
    %450 = vmatpush1.msra.mxu0 0.0
    %451 = vmatprep.subr.mxu0 0.0
    %452 = vmatpush1.msra.mxu0 0.0
    %453 = vmatprep.subr.mxu0 0.0
    %454 = vmatpush1.msra.mxu0 0.0
    %455 = vmatprep.subr.mxu0 0.0
    %456 = vmatpush1.msra.mxu0 0.0
    %457 = vmatprep.subr.mxu0 0.0
    %458 = vmatpush1.msra.mxu0 0.0
    %459 = vmatprep.subr.mxu0 0.0
    %460 = vmatpush1.msra.mxu0 0.0
    %461 = vmatprep.subr.mxu0 0.0
    %462 = vmatpush1.msra.mxu0 0.0
    %463 = vmatprep.subr.mxu0 0.0
    %464 = vmatpush1.msra.mxu0 0.0
    %465 = vmatprep.subr.mxu0 0.0
    %466 = vmatpush1.msra.mxu0 0.0
    %467 = vmatprep.subr.mxu0 0.0
    %468 = vmatpush1.msra.mxu0 0.0
    %469 = vmatprep.subr.mxu0 0.0
    %470 = vmatpush1.msra.mxu0 0.0
    %471 = vmatprep.subr.mxu0 0.0
    %472 = vmatpush1.msra.mxu0 0.0
    %473 = vmatprep.subr.mxu0 0.0
    %474 = vmatpush1.msra.mxu0 0.0
    %475 = vmatprep.subr.mxu0 0.0
    %476 = vmatpush1.msra.mxu0 0.0
    %477 = vmatprep.subr.mxu0 0.0
    %478 = vmatpush1.msra.mxu0 0.0
    %479 = vmatprep.subr.mxu0 0.0
    %480 = vmatpush1.msra.mxu0 0.0
    %481 = vmatprep.subr.mxu0 0.0
    %482 = vmatpush1.msra.mxu0 0.0
    %483 = vmatprep.subr.mxu0 0.0
    %484 = vmatpush1.msra.mxu0 0.0
    %485 = vmatprep.subr.mxu0 0.0
    %486 = vmatpush1.msra.mxu0 0.0
    %487 = vmatprep.subr.mxu0 0.0
    %488 = vmatpush1.msra.mxu0 0.0
    %489 = vmatprep.subr.mxu0 0.0
    %490 = vmatpush1.msra.mxu0 0.0
    %491 = vmatprep.subr.mxu0 0.0
    %492 = vmatpush1.msra.mxu0 0.0
    %493 = vmatprep.subr.mxu0 0.0
    %494 = vmatpush1.msra.mxu0 0.0
    %495 = vmatprep.subr.mxu0 0.0
    %496 = vmatpush1.msra.mxu0 0.0
    %497 = vmatprep.subr.mxu0 0.0
    %498 = vmatpush1.msra.mxu0 0.0
    %499 = vmatprep.subr.mxu0 0.0
    %500 = vmatpush1.msra.mxu0 0.0
    %501 = vmatprep.subr.mxu0 0.0
    %502 = vmatpush1.msra.mxu0 0.0
    %503 = vmatprep.subr.mxu0 0.0
    %504 = vmatpush1.msra.mxu0 0.0
    %505 = vmatprep.subr.mxu0 0.0
    %506 = vmatpush1.msra.mxu0 0.0
    %507 = vmatprep.subr.mxu0 0.0
    %508 = vmatpush1.msra.mxu0 0.0
    %509 = vmatprep.subr.mxu0 0.0
    %510 = vmatpush1.msra.mxu0 0.0
    %511 = vmatprep.mubr.f32.mxu0 0.0
    %v512 = vand.u32 %v42, 4294901760
    %513 = vmatmul.mubr.f32.gmra.mrb[0].mxu0 %v512
    %v514 = vpop.f32.mrb[0].mxu0
    %v515 = vadd.f32 %v441, %v514
    %v516 = vpop.f32.mrb[0].mxu0
    %v517 = vadd.f32 %v443, %v516
    %518 = vdwg.mxu0
    %519 = vmatprep.subr.mxu0 0.0
    %v520 = vand.u32 %v52, 4294901760
    %521 = vmatpush1.msra.mxu0 %v520
    %522 = vmatprep.subr.mxu0 0.0
    %523 = vmatpush1.msra.mxu0 0.0
    %524 = vmatprep.subr.mxu0 0.0
    %525 = vmatpush1.msra.mxu0 0.0
    %526 = vmatprep.subr.mxu0 0.0
    %527 = vmatpush1.msra.mxu0 0.0
    %528 = vmatprep.subr.mxu0 0.0
    %529 = vmatpush1.msra.mxu0 0.0
    %530 = vmatprep.subr.mxu0 0.0
    %531 = vmatpush1.msra.mxu0 0.0
    %532 = vmatprep.subr.mxu0 0.0
    %533 = vmatpush1.msra.mxu0 0.0
    %534 = vmatprep.subr.mxu0 0.0
    %535 = vmatpush1.msra.mxu0 0.0
    %536 = vmatprep.subr.mxu0 0.0
    %537 = vmatpush1.msra.mxu0 0.0
    %538 = vmatprep.subr.mxu0 0.0
    %539 = vmatpush1.msra.mxu0 0.0
    %540 = vmatprep.subr.mxu0 0.0
    %541 = vmatpush1.msra.mxu0 0.0
    %542 = vmatprep.subr.mxu0 0.0
    %543 = vmatpush1.msra.mxu0 0.0
    %544 = vmatprep.subr.mxu0 0.0
    %545 = vmatpush1.msra.mxu0 0.0
    %546 = vmatprep.subr.mxu0 0.0
    %547 = vmatpush1.msra.mxu0 0.0
    %548 = vmatprep.subr.mxu0 0.0
    %549 = vmatpush1.msra.mxu0 0.0
    %550 = vmatprep.subr.mxu0 0.0
    %551 = vmatpush1.msra.mxu0 0.0
    %552 = vmatprep.subr.mxu0 0.0
    %553 = vmatpush1.msra.mxu0 0.0
    %554 = vmatprep.subr.mxu0 0.0
    %555 = vmatpush1.msra.mxu0 0.0
    %556 = vmatprep.subr.mxu0 0.0
    %557 = vmatpush1.msra.mxu0 0.0
    %558 = vmatprep.subr.mxu0 0.0
    %559 = vmatpush1.msra.mxu0 0.0
    %560 = vmatprep.subr.mxu0 0.0
    %561 = vmatpush1.msra.mxu0 0.0
    %562 = vmatprep.subr.mxu0 0.0
    %563 = vmatpush1.msra.mxu0 0.0
    %564 = vmatprep.subr.mxu0 0.0
    %565 = vmatpush1.msra.mxu0 0.0
    %566 = vmatprep.subr.mxu0 0.0
    %567 = vmatpush1.msra.mxu0 0.0
    %568 = vmatprep.subr.mxu0 0.0
    %569 = vmatpush1.msra.mxu0 0.0
    %570 = vmatprep.subr.mxu0 0.0
    %571 = vmatpush1.msra.mxu0 0.0
    %572 = vmatprep.subr.mxu0 0.0
    %573 = vmatpush1.msra.mxu0 0.0
    %574 = vmatprep.subr.mxu0 0.0
    %575 = vmatpush1.msra.mxu0 0.0
    %576 = vmatprep.subr.mxu0 0.0
    %577 = vmatpush1.msra.mxu0 0.0
    %578 = vmatprep.subr.mxu0 0.0
    %579 = vmatpush1.msra.mxu0 0.0
    %580 = vmatprep.subr.mxu0 0.0
    %581 = vmatpush1.msra.mxu0 0.0
    %582 = vmatprep.subr.mxu0 0.0
    %583 = vmatpush1.msra.mxu0 0.0
    %584 = vmatprep.mubr.f32.mxu0 0.0
    %v585 = vand.u32 %v42, 4294901760
    %v586 = vsub.f32 %v42, %v585
    %v587 = vand.u32 %v586, 4294901760
    %v588 = vsub.f32 %v586, %v587
    %v589 = vand.u32 %v588, 4294901760
    %590 = vmatmul.mubr.f32.gmra.mrb[0].mxu0 %v589
    %v591 = vpop.f32.mrb[0].mxu0
    %v592 = vadd.f32 0.0, %v591
    %v593 = vpop.f32.mrb[0].mxu0
    %594 = vdwg.mxu0
    %595 = vmatprep.subr.mxu0 0.0
    %v596 = vand.u32 %v52, 4294901760
    %v597 = vsub.f32 %v52, %v596
    %v598 = vand.u32 %v597, 4294901760
    %v599 = vsub.f32 %v597, %v598
    %v600 = vand.u32 %v599, 4294901760
    %601 = vmatpush1.msra.mxu0 %v600
    %602 = vmatprep.subr.mxu0 0.0
    %603 = vmatpush1.msra.mxu0 0.0
    %604 = vmatprep.subr.mxu0 0.0
    %605 = vmatpush1.msra.mxu0 0.0
    %606 = vmatprep.subr.mxu0 0.0
    %607 = vmatpush1.msra.mxu0 0.0
    %608 = vmatprep.subr.mxu0 0.0
    %609 = vmatpush1.msra.mxu0 0.0
    %610 = vmatprep.subr.mxu0 0.0
    %611 = vmatpush1.msra.mxu0 0.0
    %612 = vmatprep.subr.mxu0 0.0
    %613 = vmatpush1.msra.mxu0 0.0
    %614 = vmatprep.subr.mxu0 0.0
    %615 = vmatpush1.msra.mxu0 0.0
    %616 = vmatprep.subr.mxu0 0.0
    %617 = vmatpush1.msra.mxu0 0.0
    %618 = vmatprep.subr.mxu0 0.0
    %619 = vmatpush1.msra.mxu0 0.0
    %620 = vmatprep.subr.mxu0 0.0
    %621 = vmatpush1.msra.mxu0 0.0
    %622 = vmatprep.subr.mxu0 0.0
    %623 = vmatpush1.msra.mxu0 0.0
    %624 = vmatprep.subr.mxu0 0.0
    %625 = vmatpush1.msra.mxu0 0.0
    %626 = vmatprep.subr.mxu0 0.0
    %627 = vmatpush1.msra.mxu0 0.0
    %628 = vmatprep.subr.mxu0 0.0
    %629 = vmatpush1.msra.mxu0 0.0
    %630 = vmatprep.subr.mxu0 0.0
    %631 = vmatpush1.msra.mxu0 0.0
    %632 = vmatprep.subr.mxu0 0.0
    %633 = vmatpush1.msra.mxu0 0.0
    %634 = vmatprep.subr.mxu0 0.0
    %635 = vmatpush1.msra.mxu0 0.0
    %636 = vmatprep.subr.mxu0 0.0
    %637 = vmatpush1.msra.mxu0 0.0
    %638 = vmatprep.subr.mxu0 0.0
    %639 = vmatpush1.msra.mxu0 0.0
    %640 = vmatprep.subr.mxu0 0.0
    %641 = vmatpush1.msra.mxu0 0.0
    %642 = vmatprep.subr.mxu0 0.0
    %643 = vmatpush1.msra.mxu0 0.0
    %644 = vmatprep.subr.mxu0 0.0
    %645 = vmatpush1.msra.mxu0 0.0
    %646 = vmatprep.subr.mxu0 0.0
    %647 = vmatpush1.msra.mxu0 0.0
    %648 = vmatprep.subr.mxu0 0.0
    %649 = vmatpush1.msra.mxu0 0.0
    %650 = vmatprep.subr.mxu0 0.0
    %651 = vmatpush1.msra.mxu0 0.0
    %652 = vmatprep.subr.mxu0 0.0
    %653 = vmatpush1.msra.mxu0 0.0
    %654 = vmatprep.subr.mxu0 0.0
    %655 = vmatpush1.msra.mxu0 0.0
    %656 = vmatprep.subr.mxu0 0.0
    %657 = vmatpush1.msra.mxu0 0.0
    %658 = vmatprep.subr.mxu0 0.0
    %659 = vmatpush1.msra.mxu0 0.0
    %660 = vmatprep.subr.mxu0 0.0
    %661 = vmatpush1.msra.mxu0 0.0
    %662 = vmatprep.subr.mxu0 0.0
    %663 = vmatpush1.msra.mxu0 0.0
    %664 = vmatprep.mubr.f32.mxu0 0.0
    %v665 = vand.u32 %v42, 4294901760
    %666 = vmatmul.mubr.f32.gmra.mrb[0].mxu0 %v665
    %v667 = vpop.f32.mrb[0].mxu0
    %v668 = vadd.f32 %v592, %v667
    %v669 = vpop.f32.mrb[0].mxu0
    %670 = vdwg.mxu0
    %671 = vmatprep.subr.mxu0 0.0
    %v672 = vand.u32 %v52, 4294901760
    %v673 = vsub.f32 %v52, %v672
    %674 = vmatpush1.msra.mxu0 %v673
    %675 = vmatprep.subr.mxu0 0.0
    %676 = vmatpush1.msra.mxu0 0.0
    %677 = vmatprep.subr.mxu0 0.0
    %678 = vmatpush1.msra.mxu0 0.0
    %679 = vmatprep.subr.mxu0 0.0
    %680 = vmatpush1.msra.mxu0 0.0
    %681 = vmatprep.subr.mxu0 0.0
    %682 = vmatpush1.msra.mxu0 0.0
    %683 = vmatprep.subr.mxu0 0.0
    %684 = vmatpush1.msra.mxu0 0.0
    %685 = vmatprep.subr.mxu0 0.0
    %686 = vmatpush1.msra.mxu0 0.0
    %687 = vmatprep.subr.mxu0 0.0
    %688 = vmatpush1.msra.mxu0 0.0
    %689 = vmatprep.subr.mxu0 0.0
    %690 = vmatpush1.msra.mxu0 0.0
    %691 = vmatprep.subr.mxu0 0.0
    %692 = vmatpush1.msra.mxu0 0.0
    %693 = vmatprep.subr.mxu0 0.0
    %694 = vmatpush1.msra.mxu0 0.0
    %695 = vmatprep.subr.mxu0 0.0
    %696 = vmatpush1.msra.mxu0 0.0
    %697 = vmatprep.subr.mxu0 0.0
    %698 = vmatpush1.msra.mxu0 0.0
    %699 = vmatprep.subr.mxu0 0.0
    %700 = vmatpush1.msra.mxu0 0.0
    %701 = vmatprep.subr.mxu0 0.0
    %702 = vmatpush1.msra.mxu0 0.0
    %703 = vmatprep.subr.mxu0 0.0
    %704 = vmatpush1.msra.mxu0 0.0
    %705 = vmatprep.subr.mxu0 0.0
    %706 = vmatpush1.msra.mxu0 0.0
    %707 = vmatprep.subr.mxu0 0.0
    %708 = vmatpush1.msra.mxu0 0.0
    %709 = vmatprep.subr.mxu0 0.0
    %710 = vmatpush1.msra.mxu0 0.0
    %711 = vmatprep.subr.mxu0 0.0
    %712 = vmatpush1.msra.mxu0 0.0
    %713 = vmatprep.subr.mxu0 0.0
    %714 = vmatpush1.msra.mxu0 0.0
    %715 = vmatprep.subr.mxu0 0.0
    %716 = vmatpush1.msra.mxu0 0.0
    %717 = vmatprep.subr.mxu0 0.0
    %718 = vmatpush1.msra.mxu0 0.0
    %719 = vmatprep.subr.mxu0 0.0
    %720 = vmatpush1.msra.mxu0 0.0
    %721 = vmatprep.subr.mxu0 0.0
    %722 = vmatpush1.msra.mxu0 0.0
    %723 = vmatprep.subr.mxu0 0.0
    %724 = vmatpush1.msra.mxu0 0.0
    %725 = vmatprep.subr.mxu0 0.0
    %726 = vmatpush1.msra.mxu0 0.0
    %727 = vmatprep.subr.mxu0 0.0
    %728 = vmatpush1.msra.mxu0 0.0
    %729 = vmatprep.subr.mxu0 0.0
    %730 = vmatpush1.msra.mxu0 0.0
    %731 = vmatprep.subr.mxu0 0.0
    %732 = vmatpush1.msra.mxu0 0.0
    %733 = vmatprep.subr.mxu0 0.0
    %734 = vmatpush1.msra.mxu0 0.0
    %735 = vmatprep.subr.mxu0 0.0
    %736 = vmatpush1.msra.mxu0 0.0
    %737 = vmatprep.mubr.f32.mxu0 0.0
    %v738 = vand.u32 %v42, 4294901760
    %v739 = vsub.f32 %v42, %v738
    %740 = vmatmul.mubr.f32.gmra.mrb[0].mxu0 %v739
    %v741 = vpop.f32.mrb[0].mxu0
    %v742 = vadd.f32 %v668, %v741
    %v743 = vpop.f32.mrb[0].mxu0
    %744 = vdwg.mxu0
    %745 = vmatprep.subr.mxu0 0.0
    %v746 = vand.u32 %v52, 4294901760
    %747 = vmatpush1.msra.mxu0 %v746
    %748 = vmatprep.subr.mxu0 0.0
    %749 = vmatpush1.msra.mxu0 0.0
    %750 = vmatprep.subr.mxu0 0.0
    %751 = vmatpush1.msra.mxu0 0.0
    %752 = vmatprep.subr.mxu0 0.0
    %753 = vmatpush1.msra.mxu0 0.0
    %754 = vmatprep.subr.mxu0 0.0
    %755 = vmatpush1.msra.mxu0 0.0
    %756 = vmatprep.subr.mxu0 0.0
    %757 = vmatpush1.msra.mxu0 0.0
    %758 = vmatprep.subr.mxu0 0.0
    %759 = vmatpush1.msra.mxu0 0.0
    %760 = vmatprep.subr.mxu0 0.0
    %761 = vmatpush1.msra.mxu0 0.0
    %762 = vmatprep.subr.mxu0 0.0
    %763 = vmatpush1.msra.mxu0 0.0
    %764 = vmatprep.subr.mxu0 0.0
    %765 = vmatpush1.msra.mxu0 0.0
    %766 = vmatprep.subr.mxu0 0.0
    %767 = vmatpush1.msra.mxu0 0.0
    %768 = vmatprep.subr.mxu0 0.0
    %769 = vmatpush1.msra.mxu0 0.0
    %770 = vmatprep.subr.mxu0 0.0
    %771 = vmatpush1.msra.mxu0 0.0
    %772 = vmatprep.subr.mxu0 0.0
    %773 = vmatpush1.msra.mxu0 0.0
    %774 = vmatprep.subr.mxu0 0.0
    %775 = vmatpush1.msra.mxu0 0.0
    %776 = vmatprep.subr.mxu0 0.0
    %777 = vmatpush1.msra.mxu0 0.0
    %778 = vmatprep.subr.mxu0 0.0
    %779 = vmatpush1.msra.mxu0 0.0
    %780 = vmatprep.subr.mxu0 0.0
    %781 = vmatpush1.msra.mxu0 0.0
    %782 = vmatprep.subr.mxu0 0.0
    %783 = vmatpush1.msra.mxu0 0.0
    %784 = vmatprep.subr.mxu0 0.0
    %785 = vmatpush1.msra.mxu0 0.0
    %786 = vmatprep.subr.mxu0 0.0
    %787 = vmatpush1.msra.mxu0 0.0
    %788 = vmatprep.subr.mxu0 0.0
    %789 = vmatpush1.msra.mxu0 0.0
    %790 = vmatprep.subr.mxu0 0.0
    %791 = vmatpush1.msra.mxu0 0.0
    %792 = vmatprep.subr.mxu0 0.0
    %793 = vmatpush1.msra.mxu0 0.0
    %794 = vmatprep.subr.mxu0 0.0
    %795 = vmatpush1.msra.mxu0 0.0
    %796 = vmatprep.subr.mxu0 0.0
    %797 = vmatpush1.msra.mxu0 0.0
    %798 = vmatprep.subr.mxu0 0.0
    %799 = vmatpush1.msra.mxu0 0.0
    %800 = vmatprep.subr.mxu0 0.0
    %801 = vmatpush1.msra.mxu0 0.0
    %802 = vmatprep.subr.mxu0 0.0
    %803 = vmatpush1.msra.mxu0 0.0
    %804 = vmatprep.subr.mxu0 0.0
    %805 = vmatpush1.msra.mxu0 0.0
    %806 = vmatprep.subr.mxu0 0.0
    %807 = vmatpush1.msra.mxu0 0.0
    %808 = vmatprep.subr.mxu0 0.0
    %809 = vmatpush1.msra.mxu0 0.0
    %810 = vmatprep.mubr.f32.mxu0 0.0
    %v811 = vand.u32 %v42, 4294901760
    %v812 = vsub.f32 %v42, %v811
    %v813 = vand.u32 %v812, 4294901760
    %814 = vmatmul.mubr.f32.gmra.mrb[0].mxu0 %v813
    %v815 = vpop.f32.mrb[0].mxu0
    %v816 = vadd.f32 %v742, %v815
    %v817 = vpop.f32.mrb[0].mxu0
    %818 = vdwg.mxu0
    %819 = vmatprep.subr.mxu0 0.0
    %v820 = vand.u32 %v52, 4294901760
    %v821 = vsub.f32 %v52, %v820
    %v822 = vand.u32 %v821, 4294901760
    %823 = vmatpush1.msra.mxu0 %v822
    %824 = vmatprep.subr.mxu0 0.0
    %825 = vmatpush1.msra.mxu0 0.0
    %826 = vmatprep.subr.mxu0 0.0
    %827 = vmatpush1.msra.mxu0 0.0
    %828 = vmatprep.subr.mxu0 0.0
    %829 = vmatpush1.msra.mxu0 0.0
    %830 = vmatprep.subr.mxu0 0.0
    %831 = vmatpush1.msra.mxu0 0.0
    %832 = vmatprep.subr.mxu0 0.0
    %833 = vmatpush1.msra.mxu0 0.0
    %834 = vmatprep.subr.mxu0 0.0
    %835 = vmatpush1.msra.mxu0 0.0
    %836 = vmatprep.subr.mxu0 0.0
    %837 = vmatpush1.msra.mxu0 0.0
    %838 = vmatprep.subr.mxu0 0.0
    %839 = vmatpush1.msra.mxu0 0.0
    %840 = vmatprep.subr.mxu0 0.0
    %841 = vmatpush1.msra.mxu0 0.0
    %842 = vmatprep.subr.mxu0 0.0
    %843 = vmatpush1.msra.mxu0 0.0
    %844 = vmatprep.subr.mxu0 0.0
    %845 = vmatpush1.msra.mxu0 0.0
    %846 = vmatprep.subr.mxu0 0.0
    %847 = vmatpush1.msra.mxu0 0.0
    %848 = vmatprep.subr.mxu0 0.0
    %849 = vmatpush1.msra.mxu0 0.0
    %850 = vmatprep.subr.mxu0 0.0
    %851 = vmatpush1.msra.mxu0 0.0
    %852 = vmatprep.subr.mxu0 0.0
    %853 = vmatpush1.msra.mxu0 0.0
    %854 = vmatprep.subr.mxu0 0.0
    %855 = vmatpush1.msra.mxu0 0.0
    %856 = vmatprep.subr.mxu0 0.0
    %857 = vmatpush1.msra.mxu0 0.0
    %858 = vmatprep.subr.mxu0 0.0
    %859 = vmatpush1.msra.mxu0 0.0
    %860 = vmatprep.subr.mxu0 0.0
    %861 = vmatpush1.msra.mxu0 0.0
    %862 = vmatprep.subr.mxu0 0.0
    %863 = vmatpush1.msra.mxu0 0.0
    %864 = vmatprep.subr.mxu0 0.0
    %865 = vmatpush1.msra.mxu0 0.0
    %866 = vmatprep.subr.mxu0 0.0
    %867 = vmatpush1.msra.mxu0 0.0
    %868 = vmatprep.subr.mxu0 0.0
    %869 = vmatpush1.msra.mxu0 0.0
    %870 = vmatprep.subr.mxu0 0.0
    %871 = vmatpush1.msra.mxu0 0.0
    %872 = vmatprep.subr.mxu0 0.0
    %873 = vmatpush1.msra.mxu0 0.0
    %874 = vmatprep.subr.mxu0 0.0
    %875 = vmatpush1.msra.mxu0 0.0
    %876 = vmatprep.subr.mxu0 0.0
    %877 = vmatpush1.msra.mxu0 0.0
    %878 = vmatprep.subr.mxu0 0.0
    %879 = vmatpush1.msra.mxu0 0.0
    %880 = vmatprep.subr.mxu0 0.0
    %881 = vmatpush1.msra.mxu0 0.0
    %882 = vmatprep.subr.mxu0 0.0
    %883 = vmatpush1.msra.mxu0 0.0
    %884 = vmatprep.subr.mxu0 0.0
    %885 = vmatpush1.msra.mxu0 0.0
    %886 = vmatprep.mubr.f32.mxu0 0.0
    %v887 = vand.u32 %v42, 4294901760
    %888 = vmatmul.mubr.f32.gmra.mrb[0].mxu0 %v887
    %v889 = vpop.f32.mrb[0].mxu0
    %v890 = vadd.f32 %v816, %v889
    %v891 = vpop.f32.mrb[0].mxu0
    %892 = vdwg.mxu0
    %893 = vmatprep.subr.mxu0 0.0
    %v894 = vand.u32 %v52, 4294901760
    %895 = vmatpush1.msra.mxu0 %v894
    %896 = vmatprep.subr.mxu0 0.0
    %897 = vmatpush1.msra.mxu0 0.0
    %898 = vmatprep.subr.mxu0 0.0
    %899 = vmatpush1.msra.mxu0 0.0
    %900 = vmatprep.subr.mxu0 0.0
    %901 = vmatpush1.msra.mxu0 0.0
    %902 = vmatprep.subr.mxu0 0.0
    %903 = vmatpush1.msra.mxu0 0.0
    %904 = vmatprep.subr.mxu0 0.0
    %905 = vmatpush1.msra.mxu0 0.0
    %906 = vmatprep.subr.mxu0 0.0
    %907 = vmatpush1.msra.mxu0 0.0
    %908 = vmatprep.subr.mxu0 0.0
    %909 = vmatpush1.msra.mxu0 0.0
    %910 = vmatprep.subr.mxu0 0.0
    %911 = vmatpush1.msra.mxu0 0.0
    %912 = vmatprep.subr.mxu0 0.0
    %913 = vmatpush1.msra.mxu0 0.0
    %914 = vmatprep.subr.mxu0 0.0
    %915 = vmatpush1.msra.mxu0 0.0
    %916 = vmatprep.subr.mxu0 0.0
    %917 = vmatpush1.msra.mxu0 0.0
    %918 = vmatprep.subr.mxu0 0.0
    %919 = vmatpush1.msra.mxu0 0.0
    %920 = vmatprep.subr.mxu0 0.0
    %921 = vmatpush1.msra.mxu0 0.0
    %922 = vmatprep.subr.mxu0 0.0
    %923 = vmatpush1.msra.mxu0 0.0
    %924 = vmatprep.subr.mxu0 0.0
    %925 = vmatpush1.msra.mxu0 0.0
    %926 = vmatprep.subr.mxu0 0.0
    %927 = vmatpush1.msra.mxu0 0.0
    %928 = vmatprep.subr.mxu0 0.0
    %929 = vmatpush1.msra.mxu0 0.0
    %930 = vmatprep.subr.mxu0 0.0
    %931 = vmatpush1.msra.mxu0 0.0
    %932 = vmatprep.subr.mxu0 0.0
    %933 = vmatpush1.msra.mxu0 0.0
    %934 = vmatprep.subr.mxu0 0.0
    %935 = vmatpush1.msra.mxu0 0.0
    %936 = vmatprep.subr.mxu0 0.0
    %937 = vmatpush1.msra.mxu0 0.0
    %938 = vmatprep.subr.mxu0 0.0
    %939 = vmatpush1.msra.mxu0 0.0
    %940 = vmatprep.subr.mxu0 0.0
    %941 = vmatpush1.msra.mxu0 0.0
    %942 = vmatprep.subr.mxu0 0.0
    %943 = vmatpush1.msra.mxu0 0.0
    %944 = vmatprep.subr.mxu0 0.0
    %945 = vmatpush1.msra.mxu0 0.0
    %946 = vmatprep.subr.mxu0 0.0
    %947 = vmatpush1.msra.mxu0 0.0
    %948 = vmatprep.subr.mxu0 0.0
    %949 = vmatpush1.msra.mxu0 0.0
    %950 = vmatprep.subr.mxu0 0.0
    %951 = vmatpush1.msra.mxu0 0.0
    %952 = vmatprep.subr.mxu0 0.0
    %953 = vmatpush1.msra.mxu0 0.0
    %954 = vmatprep.subr.mxu0 0.0
    %955 = vmatpush1.msra.mxu0 0.0
    %956 = vmatprep.subr.mxu0 0.0
    %957 = vmatpush1.msra.mxu0 0.0
    %958 = vmatprep.mubr.f32.mxu0 0.0
    %v959 = vand.u32 %v42, 4294901760
    %960 = vmatmul.mubr.f32.gmra.mrb[0].mxu0 %v959
    %v961 = vpop.f32.mrb[0].mxu0
    %v962 = vadd.f32 %v890, %v961
    %v963 = vpop.f32.mrb[0].mxu0
    %964 = vdwg.mxu0
    %v965 = vand.u32 2147483647, %v515
    %vm966 = vcmp.le.f32.partialorder %v965, 0.7853982
    %vm967 = vcmp.lt.s32.totalorder %v515, 0
    %v968 = vand.u32 %v515, 2139095040
    %v969 = vshrl.u32 %v968, 23
    %v970 = vsub.s32 %v969, 127
    %v971 = vand.u32 2147483647, %v515
    %v972 = vand.u32 %v971, 8388607
    %v973 = vor.u32 %v972, 8388608
    %v974 = vsub.s32 0, %v973
    %v975 = vadd.s32 %v970, 1
    %vm976 = vcmp.gt.s32.totalorder %v975, 0
    %v977 = vsel %vm976, %v975, 0
    %v978 = vshrl.u32 %v977, 5
    %v979 = vand.u32 %v977, 31
    %v980 = vsub.s32 32, %v979
    %v981 = vshrl.u32 683565275, %v980
    %v982 = vshll.u32 683565275, %v979
    %v983 = vshrl.u32 2475754826, %v980
    %v984 = vor.u32 %v982, %v983
    %v985 = vshll.u32 2475754826, %v979
    %v986 = vshrl.u32 2131351028, %v980
    %v987 = vor.u32 %v985, %v986
    %v988 = vshll.u32 2131351028, %v979
    %v989 = vshrl.u32 2102212464, %v980
    %v990 = vor.u32 %v988, %v989
    %v991 = vshll.u32 2102212464, %v979
    %v992 = vshrl.u32 920167782, %v980
    %v993 = vor.u32 %v991, %v992
    %v994 = vshll.u32 920167782, %v979
    %v995 = vshrl.u32 1326507024, %v980
    %v996 = vor.u32 %v994, %v995
    %vm997 = vcmp.lt.s32.totalorder %v978, 1
    %vm998 = vcmp.lt.s32.totalorder %v978, 2
    %vm999 = vcmp.lt.s32.totalorder %v978, 3
    %vm1000 = vcmp.lt.s32.totalorder %v978, 4
    %v1001 = vsel %vm997, %v981, %v984
    %v1002 = vsel %vm1000, %v990, 2102212464
    %v1003 = vsel %vm999, %v987, %v1002
    %v1004 = vsel %vm998, %v1001, %v1003
    %v1005 = vsel %vm997, %v984, %v987
    %v1006 = vsel %vm1000, %v993, 920167782
    %v1007 = vsel %vm999, %v990, %v1006
    %v1008 = vsel %vm998, %v1005, %v1007
    %v1009 = vsel %vm997, %v987, %v990
    %v1010 = vsel %vm1000, %v996, 1326507024
    %v1011 = vsel %vm999, %v993, %v1010
    %v1012 = vsel %vm998, %v1009, %v1011
    %v1013 = vshll.u32 %v973, 8
    %v1014 = vmul.u32.u64.compose %v1013, %v1012
    %v1015 = vextract.low.u32 %v1014
    %v1016 = vextract.high.u32 %v1014
    %v1017 = vmul.u32.u64.compose %v1013, %v1008
    %v1018 = vextract.low.u32 %v1017
    %v1019 = vextract.high.u32 %v1017
    %v1020 = vmul.u32 %v1013, %v1004
    %v1021 = vadd.s32 %v1016, %v1018
    %vm1022 = vc.u32 %v1016, %v1018
    %v1023 = vadd.s32 %v1019, 1
    %v1024 = vsel %vm1022, %v1023, %v1019
    %v1025 = vadd.s32 %v1020, %v1024
    %v1026 = vadd.s32 %v1025, 536870912
    %v1027 = vshrl.u32 %v1026, 30
    %v1028 = vshll.u32 %v1027, 30
    %v1029 = vsub.s32 %v1025, %v1028
    %vm1030 = vcmp.lt.s32.totalorder %v1029, 0
    %v1031 = vsub.s32 0, %v1029
    %v1032 = vsel %vm1030, %v1031, %v1029
    %v1033 = vclz %v1032
    %v1034 = vsub.s32 %v1033, 2
    %vm1035 = vcmp.gt.s32.totalorder 0, %v1034
    %v1036 = vsel %vm1035, 0, %v1034
    %v1037 = vsub.s32 32, %v1036
    %v1038 = vshll.u32 %v1029, %v1036
    %v1039 = vshrl.u32 %v1021, %v1037
    %v1040 = vor.u32 %v1038, %v1039
    %v1041 = vsub.s32 4294967266, %v1036
    %v1042 = vadd.s32 %v1041, 127
    %v1043 = vshll.u32 %v1042, 23
    %v1044 = vor.u32 4788187, %v1043
    %v1045 = vand.u32 2147483647, %v1044
    %v1047 = vcvt.s32.f32 %v1040
    %v1048 = vmul.f32 %v1047, %v1045
    %v1049 = vxor.u32 %v1048, 2147483648
    %v1050 = vsel %vm967, %v1049, %v1048
    %v1051 = vsub.s32 4, %v1027
    %v1052 = vsel %vm967, %v1051, %v1027
    %v1053 = vsel %vm966, %v515, %v1050
    %v1054 = vsel %vm966, 0, %v1052
    %v1055 = vcosq.f32.pop %v1053
    %v1056 = vsinq.f32.pop %v1053
    %vm1057 = vweird.f32 %v515
    %v1058 = vadd.s32 %v1054, 3
    %v1059 = vand.u32 %v1058, 3
    %vm1060 = vcmp.lt.s32.totalorder %v1059, 2
    %vm1061 = vcmp.eq.s32.totalorder %v1059, 0
    %v1062 = vxor.u32 %v1056, 2147483648
    %v1063 = vsel %vm1061, %v1055, %v1062
    %vm1064 = vcmp.eq.s32.totalorder %v1059, 2
    %v1065 = vxor.u32 %v1055, 2147483648
    %v1066 = vsel %vm1064, %v1065, %v1056
    %v1067 = vsel %vm1060, %v1063, %v1066
    %v1068 = vsel %vm1057, nan, %v1067
    %v1069 = vand.u32 2147483647, %v517
    %vm1070 = vcmp.le.f32.partialorder %v1069, 0.7853982
    %vm1071 = vcmp.lt.s32.totalorder %v517, 0
    %v1072 = vand.u32 %v517, 2139095040
    %v1073 = vshrl.u32 %v1072, 23
    %v1074 = vsub.s32 %v1073, 127
    %v1075 = vand.u32 2147483647, %v517
    %v1076 = vand.u32 %v1075, 8388607
    %v1077 = vor.u32 %v1076, 8388608
    %v1078 = vsub.s32 0, %v1077
    %v1079 = vadd.s32 %v1074, 1
    %vm1080 = vcmp.gt.s32.totalorder %v1079, 0
    %v1081 = vsel %vm1080, %v1079, 0
    %v1082 = vshrl.u32 %v1081, 5
    %v1083 = vand.u32 %v1081, 31
    %v1084 = vsub.s32 32, %v1083
    %v1085 = vshrl.u32 683565275, %v1084
    %v1086 = vshll.u32 683565275, %v1083
    %v1087 = vshrl.u32 2475754826, %v1084
    %v1088 = vor.u32 %v1086, %v1087
    %v1089 = vshll.u32 2475754826, %v1083
    %v1090 = vshrl.u32 2131351028, %v1084
    %v1091 = vor.u32 %v1089, %v1090
    %v1092 = vshll.u32 2131351028, %v1083
    %v1093 = vshrl.u32 2102212464, %v1084
    %v1094 = vor.u32 %v1092, %v1093
    %v1095 = vshll.u32 2102212464, %v1083
    %v1096 = vshrl.u32 920167782, %v1084
    %v1097 = vor.u32 %v1095, %v1096
    %v1098 = vshll.u32 920167782, %v1083
    %v1099 = vshrl.u32 1326507024, %v1084
    %v1100 = vor.u32 %v1098, %v1099
    %vm1101 = vcmp.lt.s32.totalorder %v1082, 1
    %vm1102 = vcmp.lt.s32.totalorder %v1082, 2
    %vm1103 = vcmp.lt.s32.totalorder %v1082, 3
    %vm1104 = vcmp.lt.s32.totalorder %v1082, 4
    %v1105 = vsel %vm1101, %v1085, %v1088
    %v1106 = vsel %vm1104, %v1094, 2102212464
    %v1107 = vsel %vm1103, %v1091, %v1106
    %v1108 = vsel %vm1102, %v1105, %v1107
    %v1109 = vsel %vm1101, %v1088, %v1091
    %v1110 = vsel %vm1104, %v1097, 920167782
    %v1111 = vsel %vm1103, %v1094, %v1110
    %v1112 = vsel %vm1102, %v1109, %v1111
    %v1113 = vsel %vm1101, %v1091, %v1094
    %v1114 = vsel %vm1104, %v1100, 1326507024
    %v1115 = vsel %vm1103, %v1097, %v1114
    %v1116 = vsel %vm1102, %v1113, %v1115
    %v1117 = vshll.u32 %v1077, 8
    %v1118 = vmul.u32.u64.compose %v1117, %v1116
    %v1119 = vextract.low.u32 %v1118
    %v1120 = vextract.high.u32 %v1118
    %v1121 = vmul.u32.u64.compose %v1117, %v1112
    %v1122 = vextract.low.u32 %v1121
    %v1123 = vextract.high.u32 %v1121
    %v1124 = vmul.u32 %v1117, %v1108
    %v1125 = vadd.s32 %v1120, %v1122
    %vm1126 = vc.u32 %v1120, %v1122
    %v1127 = vadd.s32 %v1123, 1
    %v1128 = vsel %vm1126, %v1127, %v1123
    %v1129 = vadd.s32 %v1124, %v1128
    %v1130 = vadd.s32 %v1129, 536870912
    %v1131 = vshrl.u32 %v1130, 30
    %v1132 = vshll.u32 %v1131, 30
    %v1133 = vsub.s32 %v1129, %v1132
    %vm1134 = vcmp.lt.s32.totalorder %v1133, 0
    %v1135 = vsub.s32 0, %v1133
    %v1136 = vsel %vm1134, %v1135, %v1133
    %v1137 = vclz %v1136
    %v1138 = vsub.s32 %v1137, 2
    %vm1139 = vcmp.gt.s32.totalorder 0, %v1138
    %v1140 = vsel %vm1139, 0, %v1138
    %v1141 = vsub.s32 32, %v1140
    %v1142 = vshll.u32 %v1133, %v1140
    %v1143 = vshrl.u32 %v1125, %v1141
    %v1144 = vor.u32 %v1142, %v1143
    %v1145 = vsub.s32 4294967266, %v1140
    %v1146 = vadd.s32 %v1145, 127
    %v1147 = vshll.u32 %v1146, 23
    %v1148 = vor.u32 4788187, %v1147
    %v1149 = vand.u32 2147483647, %v1148
    %v1151 = vcvt.s32.f32 %v1144
    %v1152 = vmul.f32 %v1151, %v1149
    %v1153 = vxor.u32 %v1152, 2147483648
    %v1154 = vsel %vm1071, %v1153, %v1152
    %v1155 = vsub.s32 4, %v1131
    %v1156 = vsel %vm1071, %v1155, %v1131
    %v1157 = vsel %vm1070, %v517, %v1154
    %v1158 = vsel %vm1070, 0, %v1156
    %v1159 = vcosq.f32.pop %v1157
    %v1160 = vsinq.f32.pop %v1157
    %vm1161 = vweird.f32 %v517
    %v1162 = vadd.s32 %v1158, 3
    %v1163 = vand.u32 %v1162, 3
    %vm1164 = vcmp.lt.s32.totalorder %v1163, 2
    %vm1165 = vcmp.eq.s32.totalorder %v1163, 0
    %v1166 = vxor.u32 %v1160, 2147483648
    %v1167 = vsel %vm1165, %v1159, %v1166
    %vm1168 = vcmp.eq.s32.totalorder %v1163, 2
    %v1169 = vxor.u32 %v1159, 2147483648
    %v1170 = vsel %vm1168, %v1169, %v1160
    %v1171 = vsel %vm1164, %v1167, %v1170
    %v1172 = vsel %vm1161, nan, %v1171
    %v1173 = vand.u32 2147483647, %v962
    %vm1174 = vcmp.le.f32.partialorder %v1173, 0.7853982
    %vm1175 = vcmp.lt.s32.totalorder %v962, 0
    %v1176 = vand.u32 %v962, 2139095040
    %v1177 = vshrl.u32 %v1176, 23
    %v1178 = vsub.s32 %v1177, 127
    %v1179 = vand.u32 2147483647, %v962
    %v1180 = vand.u32 %v1179, 8388607
    %v1181 = vor.u32 %v1180, 8388608
    %v1182 = vsub.s32 0, %v1181
    %v1183 = vadd.s32 %v1178, 1
    %vm1184 = vcmp.gt.s32.totalorder %v1183, 0
    %v1185 = vsel %vm1184, %v1183, 0
    %v1186 = vshrl.u32 %v1185, 5
    %v1187 = vand.u32 %v1185, 31
    %v1188 = vsub.s32 32, %v1187
    %v1189 = vshrl.u32 683565275, %v1188
    %v1190 = vshll.u32 683565275, %v1187
    %v1191 = vshrl.u32 2475754826, %v1188
    %v1192 = vor.u32 %v1190, %v1191
    %v1193 = vshll.u32 2475754826, %v1187
    %v1194 = vshrl.u32 2131351028, %v1188
    %v1195 = vor.u32 %v1193, %v1194
    %v1196 = vshll.u32 2131351028, %v1187
    %v1197 = vshrl.u32 2102212464, %v1188
    %v1198 = vor.u32 %v1196, %v1197
    %v1199 = vshll.u32 2102212464, %v1187
    %v1200 = vshrl.u32 920167782, %v1188
    %v1201 = vor.u32 %v1199, %v1200
    %v1202 = vshll.u32 920167782, %v1187
    %v1203 = vshrl.u32 1326507024, %v1188
    %v1204 = vor.u32 %v1202, %v1203
    %vm1205 = vcmp.lt.s32.totalorder %v1186, 1
    %vm1206 = vcmp.lt.s32.totalorder %v1186, 2
    %vm1207 = vcmp.lt.s32.totalorder %v1186, 3
    %vm1208 = vcmp.lt.s32.totalorder %v1186, 4
    %v1209 = vsel %vm1205, %v1189, %v1192
    %v1210 = vsel %vm1208, %v1198, 2102212464
    %v1211 = vsel %vm1207, %v1195, %v1210
    %v1212 = vsel %vm1206, %v1209, %v1211
    %v1213 = vsel %vm1205, %v1192, %v1195
    %v1214 = vsel %vm1208, %v1201, 920167782
    %v1215 = vsel %vm1207, %v1198, %v1214
    %v1216 = vsel %vm1206, %v1213, %v1215
    %v1217 = vsel %vm1205, %v1195, %v1198
    %v1218 = vsel %vm1208, %v1204, 1326507024
    %v1219 = vsel %vm1207, %v1201, %v1218
    %v1220 = vsel %vm1206, %v1217, %v1219
    %v1221 = vshll.u32 %v1181, 8
    %v1222 = vmul.u32.u64.compose %v1221, %v1220
    %v1223 = vextract.low.u32 %v1222
    %v1224 = vextract.high.u32 %v1222
    %v1225 = vmul.u32.u64.compose %v1221, %v1216
    %v1226 = vextract.low.u32 %v1225
    %v1227 = vextract.high.u32 %v1225
    %v1228 = vmul.u32 %v1221, %v1212
    %v1229 = vadd.s32 %v1224, %v1226
    %vm1230 = vc.u32 %v1224, %v1226
    %v1231 = vadd.s32 %v1227, 1
    %v1232 = vsel %vm1230, %v1231, %v1227
    %v1233 = vadd.s32 %v1228, %v1232
    %v1234 = vadd.s32 %v1233, 536870912
    %v1235 = vshrl.u32 %v1234, 30
    %v1236 = vshll.u32 %v1235, 30
    %v1237 = vsub.s32 %v1233, %v1236
    %vm1238 = vcmp.lt.s32.totalorder %v1237, 0
    %v1239 = vsub.s32 0, %v1237
    %v1240 = vsel %vm1238, %v1239, %v1237
    %v1241 = vclz %v1240
    %v1242 = vsub.s32 %v1241, 2
    %vm1243 = vcmp.gt.s32.totalorder 0, %v1242
    %v1244 = vsel %vm1243, 0, %v1242
    %v1245 = vsub.s32 32, %v1244
    %v1246 = vshll.u32 %v1237, %v1244
    %v1247 = vshrl.u32 %v1229, %v1245
    %v1248 = vor.u32 %v1246, %v1247
    %v1249 = vsub.s32 4294967266, %v1244
    %v1250 = vadd.s32 %v1249, 127
    %v1251 = vshll.u32 %v1250, 23
    %v1252 = vor.u32 4788187, %v1251
    %v1253 = vand.u32 2147483647, %v1252
    %v1255 = vcvt.s32.f32 %v1248
    %v1256 = vmul.f32 %v1255, %v1253
    %v1257 = vxor.u32 %v1256, 2147483648
    %v1258 = vsel %vm1175, %v1257, %v1256
    %v1259 = vsub.s32 4, %v1235
    %v1260 = vsel %vm1175, %v1259, %v1235
    %v1261 = vsel %vm1174, %v962, %v1258
    %v1262 = vsel %vm1174, 0, %v1260
    %v1263 = vcosq.f32.pop %v1261
    %v1264 = vsinq.f32.pop %v1261
    %vm1265 = vweird.f32 %v962
    %v1266 = vadd.s32 %v1262, 3
    %v1267 = vand.u32 %v1266, 3
    %vm1268 = vcmp.lt.s32.totalorder %v1267, 2
    %vm1269 = vcmp.eq.s32.totalorder %v1267, 0
    %v1270 = vxor.u32 %v1264, 2147483648
    %v1271 = vsel %vm1269, %v1263, %v1270
    %vm1272 = vcmp.eq.s32.totalorder %v1267, 2
    %v1273 = vxor.u32 %v1263, 2147483648
    %v1274 = vsel %vm1272, %v1273, %v1264
    %v1275 = vsel %vm1268, %v1271, %v1274
    %v1276 = vsel %vm1265, nan, %v1275
    %1277 = vst [vmem:[#allocation7] sm:$0xff] %v1068
    %1278 = vst [vmem:[#allocation7 + $0x8] sm:$0xff] %v1172
    %1279 = vst [vmem:[#allocation7 + $0x10] sm:$0xff] %v1276
    // Predicated region
    $region18: #{tpu_custom_call.1} parent=1 // pred_check
      _
    $region19: #{tpu_custom_call.1} parent=1 // pred_check_branch
      %1281 = sbr.rel (0) target = $region21
    $region20: #{tpu_custom_call.1} parent=1 // pred_region
      %s1283 = ssub.s32 384, 384
      %1284 = vsyncadd [#allocation4], %s1283
      %s1286 = sshll.u32 [#allocation7], 4
      %s1287 = int_to_ptr.vmem [resolvable:$true] %s1286
      %1289 = dma.vmem_to_hbm [thread:$0]  %s1287, 384, %s2, [#allocation4]
    $region21: #{tpu_custom_call.1} parent=1 // pred_fallthru
      _
    // Predicated region
    $region22: #{tpu_custom_call.1} parent=1 // pred_check
      _
    $region23: #{tpu_custom_call.1} parent=1 // pred_check_branch
      %1291 = sbr.rel (0) target = $region25
    $region24: #{tpu_custom_call.1} parent=1 // pred_region
      %1292 = dma.done [#allocation4], 384
    $region25: #{tpu_custom_call.1} parent=1 // pred_fallthru
      _
    %1293 = vsyncpa [#allocation3], 1
    %1294 = vsyncpa [#allocation6], 1
    %1295 = vsyncpa [#allocation4], 1

</llo_original>
